<compile_context>
chip_gen: v6e
topology: v6e:2x2x1
jax: 0.10.0
libtpu: 0.0.40
codegen_flags: <defaults>
</compile_context>

<pallas_src>
import jax
import jax.numpy as jnp
from jax.experimental import pallas as pl
from jax.experimental.pallas import tpu as pltpu


def mtlr_kernel(x_ref, wg_ref, bg_ref, o_ref):
    # out_tile = x_tile @ (W @ G) + (b @ G), f32 accumulation on the MXU.
    # x is cast in-VMEM to the fused-weight dtype (bf16 by default): free VPU
    # work here, and it avoids a separate wrapper-side cast pass over x in HBM.
    x = x_ref[...].astype(wg_ref.dtype)
    acc = jnp.dot(x, wg_ref[...], preferred_element_type=jnp.float32)
    o_ref[...] = (acc + bg_ref[...]).astype(o_ref.dtype)


def mtlr_forward(x, weight, bias, G, *, compute_dtype=jnp.bfloat16, tile_n=2048):
    """Fused Pallas call computing (x @ weight + bias) @ G.

    compute_dtype controls the MXU input dtype (bf16 is the native MXU dtype
    on v5e/v6e/v7x; float32 is kept for exactness checks). Accumulation is
    always float32 via preferred_element_type.
    """
    N, F = x.shape
    Kp1 = G.shape[1]

    # ---- parameter-side algebraic fusion (independent of x, tiny arrays) ----
    Gf = G.astype(jnp.float32)
    Wg = jnp.dot(weight.astype(jnp.float32), Gf).astype(compute_dtype)  # (F, K+1)
    bg = jnp.dot(bias.astype(jnp.float32)[None, :], Gf)                 # (1, K+1) f32

    # ---- batch tiling -------------------------------------------------------
    # Small batch: one full-extent block (always a legal block shape).
    # Large batch: 2048-row tiles (multiple of 16 -> valid for bf16 sublane
    # packing, multiple of 512 -> big DMAs near the HBM roofline).  Pallas
    # handles the partial tail block of the cdiv grid; rows are independent so
    # the tail padding never contaminates valid output rows.
    TN = N if N <= tile_n else tile_n
    grid_n = pl.cdiv(N, TN)

    out = pl.pallas_call(
        mtlr_kernel,
        out_shape=jax.ShapeDtypeStruct((N, Kp1), jnp.float32),
        grid=(grid_n,),
        in_specs=[
            pl.BlockSpec((TN, F), lambda i: (i, 0)),    # x tile, pipelined over N
            pl.BlockSpec((F, Kp1), lambda i: (0, 0)),   # fused weight, VMEM-resident
            pl.BlockSpec((1, Kp1), lambda i: (0, 0)),   # fused bias,   VMEM-resident
        ],
        out_specs=pl.BlockSpec((TN, Kp1), lambda i: (i, 0)),
        compiler_params=pltpu.CompilerParams(
            dimension_semantics=("parallel",),  # batch axis: megacore-shardable
        ),
    )(x, Wg, bg)
    return out


if __name__ == "__main__":
    # Small shapes consistent with the module constructor:
    #   mtlr(in_features=32, num_time_bins=8)
    #     -> weight (32, 8), bias (8,), G (8, 9), output (N, 9)
    batch = 8
    in_features = 32
    num_time_bins = 8            # constructor arg
    K = num_time_bins            # weight columns (= self.num_time_bins - 1)

    key = jax.random.PRNGKey(0)
    kx, kw, kx2 = jax.random.split(key, 3)

    # Deterministic parameter init mimicking reset_parameters():
    # xavier_normal_ on weight, zeros on bias.
    std = (2.0 / (in_features + K)) ** 0.5
    weight = std * jax.random.normal(kw, (in_features, K), dtype=jnp.float32)
    bias = jnp.zeros((K,), dtype=jnp.float32)
    G = jnp.tril(jnp.ones((K, K + 1), dtype=jnp.float32))

    x = jax.random.normal(kx, (batch, in_features), dtype=jnp.float32)

    # Pure-JAX reference (same math as the PyTorch forward).
    ref = (x @ weight + bias) @ G

    # 1) f32 compute path: exactness check of kernel structure / fusion.
    out_f32 = jax.block_until_ready(
        mtlr_forward(x, weight, bias, G, compute_dtype=jnp.float32))
    assert out_f32.shape == (batch, K + 1)
    assert jnp.allclose(out_f32, ref, atol=1e-4, rtol=1e-4)

    # 2) Default bf16 MXU path, f32 accumulate.
    out_bf16 = jax.block_until_ready(mtlr_forward(x, weight, bias, G))
    assert out_bf16.shape == (batch, K + 1)
    assert jnp.allclose(out_bf16, ref, atol=5e-2, rtol=5e-2)

    # 3) Multi-block grid with a partial tail block (N not divisible by TN).
    N_big = 300
    x_big = jax.random.normal(kx2, (N_big, in_features), dtype=jnp.float32)
    ref_big = (x_big @ weight + bias) @ G
    out_big = jax.block_until_ready(
        mtlr_forward(x_big, weight, bias, G, compute_dtype=jnp.float32, tile_n=128))
    assert out_big.shape == (N_big, K + 1)
    assert jnp.allclose(out_big, ref_big, atol=1e-4, rtol=1e-4)

    print("KERNEL_OK")
</pallas_src>

<mosaic_0001>
module attributes {stable_mosaic.version = 11 : i64} {
  func.func @mtlr_kernel(%arg0: i32, %arg1: memref<8x32xf32, #tpu.memory_space<vmem>>, %arg2: memref<32x9xf32, #tpu.memory_space<vmem>>, %arg3: memref<1x9xf32, #tpu.memory_space<vmem>>, %arg4: memref<8x9xf32, #tpu.memory_space<vmem>>) attributes {dimension_semantics = [#tpu.dimension_semantics<parallel>], iteration_bounds = array<i64: 1>, scalar_prefetch = 0 : i64, scratch_operands = 0 : i64, tpu.core_type = #tpu.core_type<tc>, window_params = [{transform_indices = @transform_0, window_bounds = array<i64: 8, 32>}, {pipeline_mode = #tpu.pipeline_mode<synchronous>, transform_indices = @transform_1, window_bounds = array<i64: 32, 9>}, {pipeline_mode = #tpu.pipeline_mode<synchronous>, transform_indices = @transform_2, window_bounds = array<i64: 1, 9>}, {transform_indices = @transform_3, window_bounds = array<i64: 8, 9>}]} {
    %c0 = arith.constant 0 : index
    %c0_0 = arith.constant 0 : index
    %0 = vector.load %arg1[%c0, %c0_0] : memref<8x32xf32, #tpu.memory_space<vmem>>, vector<8x32xf32>
    %c0_1 = arith.constant 0 : index
    %c0_2 = arith.constant 0 : index
    %1 = vector.load %arg2[%c0_1, %c0_2] : memref<32x9xf32, #tpu.memory_space<vmem>>, vector<32x9xf32>
    %cst = arith.constant dense<0.000000e+00> : vector<8x9xf32>
    %2 = tpu.matmul %0, %1, %cst {dimension_numbers = #tpu.dot_dimension_numbers<[1], [0], [0], [1], [0, 0, 1, 1], [], []>} : vector<8x32xf32>, vector<32x9xf32>, vector<8x9xf32> -> vector<8x9xf32>
    %c0_3 = arith.constant 0 : index
    %c0_4 = arith.constant 0 : index
    %3 = vector.load %arg3[%c0_3, %c0_4] : memref<1x9xf32, #tpu.memory_space<vmem>>, vector<1x9xf32>
    %4 = vector.broadcast %3 : vector<1x9xf32> to vector<8x9xf32>
    %5 = arith.addf %2, %4 : vector<8x9xf32>
    %c0_5 = arith.constant 0 : index
    %c0_6 = arith.constant 0 : index
    %6 = vector.load %arg4[%c0_5, %c0_6] : memref<8x9xf32, #tpu.memory_space<vmem>>, vector<8x9xf32>
    tpu.vector_store %arg4[%c0_5, %c0_6], %5 {strides = array<i32>} : memref<8x9xf32, #tpu.memory_space<vmem>>, vector<8x9xf32>,
    return
  }
  func.func @transform_0(%arg0: i32) -> (i32, i32) {
    %c0_i32 = arith.constant 0 : i32
    %c0_i32_0 = arith.constant 0 : i32
    return %arg0, %c0_i32 : i32, i32
  }
  func.func @transform_1(%arg0: i32) -> (i32, i32) {
    %c0_i32 = arith.constant 0 : i32
    %c0_i32_0 = arith.constant 0 : i32
    %c0_i32_1 = arith.constant 0 : i32
    return %c0_i32, %c0_i32_0 : i32, i32
  }
  func.func @transform_2(%arg0: i32) -> (i32, i32) {
    %c0_i32 = arith.constant 0 : i32
    %c0_i32_0 = arith.constant 0 : i32
    %c0_i32_1 = arith.constant 0 : i32
    return %c0_i32, %c0_i32_0 : i32, i32
  }
  func.func @transform_3(%arg0: i32) -> (i32, i32) {
    %c0_i32 = arith.constant 0 : i32
    %c0_i32_0 = arith.constant 0 : i32
    return %arg0, %c0_i32 : i32, i32
  }
}

</mosaic_0001>

<llo_original>
// kernel: tpu_custom_call.1
$region0: #{tpu_custom_call.1}
  #allocation0 [shape = 'u32[]', space=smem, size = 0x4, offset = 0x4, fixed_abs, tag = 'smem constant byte address 0x4 - core index']
  #allocation1 [shape = 'u32[144,128]{1,0:T(1,128)}', space=vmem, size = 0x12000, scoped, tag = 'internal scratch']
  %s0 = inlined_call_operand.vmem [shape: f32[8,32], index: 0, kind: input, shape index: {}]
  %s1 = inlined_call_operand.vmem [shape: f32[32,9], index: 1, kind: input, shape index: {}]
  %s2 = inlined_call_operand.vmem [shape: f32[1,9], index: 2, kind: input, shape index: {}]
  %s3 = inlined_call_operand.hbm [shape: f32[8,9], index: 3, kind: output, shape index: {}]
  %s4 = sld [smem:[#allocation0]]
  $region22: #{tpu_custom_call.1} parent=0
    _
  %s6 = ssub.s32 1, %s4
  %s7 = scalar_select 0, %s6, %s4
  $region1: #{tpu_custom_call.1} parent=0
    #allocation2 [shape = 'u8[4096]{0}', space=vmem, size = 0x1000, scoped, tag = 'output window, operand 0, single buffered']
    #allocation3 [shape = 's32[1]{0}', space=sflag, size = 0x4, scoped, tag = 'scoped memory for tpu_custom_call.1']
    %8 = vsyncpa [#allocation3], 0
    // Predicated region
    $region2: #{tpu_custom_call.1} parent=1 // pred_check
      _
    $region3: #{tpu_custom_call.1} parent=1 // pred_check_branch
      %10 = sbr.rel (0) target = $region5
    $region4: #{tpu_custom_call.1} parent=1 // pred_region
      _
    $region5: #{tpu_custom_call.1} parent=1 // pred_fallthru
      _
    // Predicated region
    $region6: #{tpu_custom_call.1} parent=1 // pred_check
      _
    $region7: #{tpu_custom_call.1} parent=1 // pred_check_branch
      %12 = sbr.rel (0) target = $region9
    $region8: #{tpu_custom_call.1} parent=1 // pred_region
      _
    $region9: #{tpu_custom_call.1} parent=1 // pred_fallthru
      _
    // Predicated region
    $region10: #{tpu_custom_call.1} parent=1 // pred_check
      _
    $region11: #{tpu_custom_call.1} parent=1 // pred_check_branch
      %14 = sbr.rel (0) target = $region13
    $region12: #{tpu_custom_call.1} parent=1 // pred_region
      _
    $region13: #{tpu_custom_call.1} parent=1 // pred_fallthru
      _
    %v15 = vld [vmem:[%s0] sm:$0xff]
    %v16 = vld [vmem:[%s1] sm:$0xff]
    %v17 = vld [vmem:[%s1 + $0x8] sm:$0xff]
    %v18 = vld [vmem:[%s1 + $0x10] sm:$0xff]
    %v19 = vld [vmem:[%s1 + $0x18] sm:$0xff]
    %v20 = vld [vmem:[%s2] sm:$0x1]
    %v22 = vlaneseq
    %v23 = vshrl.u32 %v22, 7
    %v24 = vsub.s32 0, %v23
    %v25 = vrot.slane %v20, %v24
    %vm27 = vcmask 261120
    %v29 = vsel %vm27, %v15, 0
    %31 = vmatprep.subr.mxu0 0.0
    %32 = vmatpush1.msra.mxu0 0.0
    %33 = vmatprep.subr.mxu0 0.0
    %34 = vmatpush1.msra.mxu0 0.0
    %35 = vmatprep.subr.mxu0 0.0
    %36 = vmatpush1.msra.mxu0 0.0
    %37 = vmatprep.subr.mxu0 0.0
    %38 = vmatpush1.msra.mxu0 0.0
    %39 = vmatprep.subr.mxu0 0.0
    %40 = vmatpush1.msra.mxu0 0.0
    %41 = vmatprep.subr.mxu0 0.0
    %42 = vmatpush1.msra.mxu0 0.0
    %43 = vmatprep.subr.mxu0 0.0
    %44 = vmatpush1.msra.mxu0 0.0
    %45 = vmatprep.subr.mxu0 0.0
    %46 = vmatpush1.msra.mxu0 0.0
    %47 = vmatprep.subr.mxu0 0.0
    %48 = vmatpush1.msra.mxu0 0.0
    %49 = vmatprep.subr.mxu0 0.0
    %50 = vmatpush1.msra.mxu0 0.0
    %51 = vmatprep.subr.mxu0 0.0
    %52 = vmatpush1.msra.mxu0 0.0
    %53 = vmatprep.subr.mxu0 0.0
    %54 = vmatpush1.msra.mxu0 0.0
    %55 = vmatprep.subr.mxu0 0.0
    %56 = vmatpush1.msra.mxu0 %v19
    %57 = vmatprep.subr.mxu0 0.0
    %58 = vmatpush1.msra.mxu0 %v18
    %59 = vmatprep.subr.mxu0 0.0
    %60 = vmatpush1.msra.mxu0 %v17
    %61 = vmatprep.subr.mxu0 0.0
    %62 = vmatpush1.msra.mxu0 %v16
    %63 = vmatprep.subr.mxu0 0.0
    %64 = vmatpush2.msra.mxu0 0.0
    %65 = vmatprep.subr.mxu0 0.0
    %66 = vmatpush2.msra.mxu0 0.0
    %67 = vmatprep.subr.mxu0 0.0
    %68 = vmatpush2.msra.mxu0 0.0
    %69 = vmatprep.subr.mxu0 0.0
    %70 = vmatpush2.msra.mxu0 0.0
    %71 = vmatprep.subr.mxu0 0.0
    %72 = vmatpush2.msra.mxu0 0.0
    %73 = vmatprep.subr.mxu0 0.0
    %74 = vmatpush2.msra.mxu0 0.0
    %75 = vmatprep.subr.mxu0 0.0
    %76 = vmatpush2.msra.mxu0 0.0
    %77 = vmatprep.subr.mxu0 0.0
    %78 = vmatpush2.msra.mxu0 0.0
    %79 = vmatprep.subr.mxu0 0.0
    %80 = vmatpush2.msra.mxu0 0.0
    %81 = vmatprep.subr.mxu0 0.0
    %82 = vmatpush2.msra.mxu0 0.0
    %83 = vmatprep.subr.mxu0 0.0
    %84 = vmatpush2.msra.mxu0 0.0
    %85 = vmatprep.subr.mxu0 0.0
    %86 = vmatpush2.msra.mxu0 0.0
    %87 = vmatprep.subr.mxu0 0.0
    %88 = vmatpush2.msra.mxu0 0.0
    %89 = vmatprep.subr.mxu0 0.0
    %90 = vmatpush2.msra.mxu0 0.0
    %91 = vmatprep.subr.mxu0 0.0
    %92 = vmatpush2.msra.mxu0 0.0
    %93 = vmatprep.subr.mxu0 0.0
    %94 = vmatpush2.msra.mxu0 0.0
    %95 = vmatprep.mubr.f32.mxu0 0.0
    %96 = vmatmul.mubr.f32.gmra.mxu0 %v29
    %v97 = vpop.f32.mrf.mxu0
    %v98 = vadd.f32 %v25, %v97
    %v99 = vpop.f32.mrf.mxu0
    %100 = vdwg.mxu0
    %vm101 = vcmask 72704
    %102 = vst.msk [vmem:[#allocation2] sm:$0xff] %vm101, %v98
    // Predicated region
    $region14: #{tpu_custom_call.1} parent=1 // pred_check
      _
    $region15: #{tpu_custom_call.1} parent=1 // pred_check_branch
      %104 = sbr.rel (0) target = $region17
    $region16: #{tpu_custom_call.1} parent=1 // pred_region
      %s106 = ssub.s32 128, 128
      %107 = vsyncadd [#allocation3], %s106
      %s109 = sshll.u32 [#allocation2], 4
      %s110 = int_to_ptr.vmem [resolvable:$true] %s109
      %112 = dma.vmem_to_hbm [thread:$0]  %s110, 128, %s3, [#allocation3]
    $region17: #{tpu_custom_call.1} parent=1 // pred_fallthru
      _
    // Predicated region
    $region18: #{tpu_custom_call.1} parent=1 // pred_check
      _
    $region19: #{tpu_custom_call.1} parent=1 // pred_check_branch
      %114 = sbr.rel (0) target = $region21
    $region20: #{tpu_custom_call.1} parent=1 // pred_region
      %115 = dma.done [#allocation3], 128
    $region21: #{tpu_custom_call.1} parent=1 // pred_fallthru
      _
    %116 = vsyncpa [#allocation3], 1

</llo_original>
